<compile_context>
chip_gen: v6e
topology: v6e:2x2x1
jax: 0.10.0
libtpu: 0.0.40
codegen_flags: <defaults>
</compile_context>

<pallas_src>
import math
from functools import partial

import jax
import jax.numpy as jnp
from jax.experimental import pallas as pl
from jax.experimental.pallas import tpu as pltpu


# ----------------------------------------------------------------------------
# Buffer setup (registered buffer in the PyTorch module -> plain JAX here).
# ----------------------------------------------------------------------------
def make_positional_encoding_buffer(d_model: int, max_len: int = 5000) -> jnp.ndarray:
    """Sinusoidal positional-encoding buffer, shape [max_len, 1, d_model] (f32)."""
    position = jnp.arange(max_len, dtype=jnp.float32)[:, None]                    # [L, 1]
    div_term = jnp.exp(
        jnp.arange(0, d_model, 2, dtype=jnp.float32) * (-math.log(10000.0) / d_model)
    )                                                                             # [D/2]
    ang = position * div_term                                                     # [L, D/2]
    pe = jnp.zeros((max_len, 1, d_model), jnp.float32)
    pe = pe.at[:, 0, 0::2].set(jnp.sin(ang))
    pe = pe.at[:, 0, 1::2].set(jnp.cos(ang))
    return pe


# ----------------------------------------------------------------------------
# Kernels
# ----------------------------------------------------------------------------
def _add_pe_kernel(x_ref, pe_ref, o_ref):
    # x_ref: (tile_s, Bk, Dk); pe_ref: (tile_s, 1, Dk) -> sublane broadcast over batch.
    o_ref[...] = (x_ref[...] + pe_ref[...]).astype(o_ref.dtype)


def _add_pe_dropout_hwprng_kernel(seed_ref, x_ref, pe_ref, o_ref, *, threshold, inv_keep):
    # seed_ref is a scalar-prefetch SMEM ref; per-step seeding keeps the mask
    # deterministic regardless of how the grid is split across TensorCores.
    pltpu.prng_seed(seed_ref[0], pl.program_id(0))
    bits = pltpu.bitcast(pltpu.prng_random_bits(x_ref.shape), jnp.int32)
    y = x_ref[...] + pe_ref[...]
    # bits (viewed as int32) are uniform on [-2^31, 2^31):
    #   P(bits < threshold) == p  ->  keep-prob == 1 - p.
    keep = bits >= jnp.int32(threshold)
    o_ref[...] = jnp.where(keep, y * inv_keep, 0.0).astype(o_ref.dtype)


def _add_pe_dropout_bits_kernel(x_ref, pe_ref, bits_ref, o_ref, *, threshold, inv_keep):
    # Fallback path: bits streamed from HBM (non-TPU backends / debugging).
    y = x_ref[...] + pe_ref[...]
    keep = bits_ref[...] >= jnp.int32(threshold)
    o_ref[...] = jnp.where(keep, y * inv_keep, 0.0).astype(o_ref.dtype)


# ----------------------------------------------------------------------------
# Wrapper
# ----------------------------------------------------------------------------
def _choose_tile_s(seq_len: int, row_bytes: int, target_bytes: int) -> int:
    rows = max(1, target_bytes // max(1, row_bytes))
    if rows >= 8:
        rows = (rows // 8) * 8          # keep a friendly multiple of 8
    return int(min(seq_len, rows))


def positional_encoding(x, pe, *, dropout_p=0.1, training=False, rng_key=None,
                        tile_s=None, use_hw_prng=None):
    """Pallas forward of PositionalEncoding.

    x  : [S, B, D]
    pe : [max_len, 1, D]  (precomputed buffer, any float dtype)
    """
    S, B, D = x.shape
    dtype = x.dtype
    p = float(dropout_p)
    apply_dropout = bool(training) and p > 0.0

    if apply_dropout and p >= 1.0:
        return jnp.zeros_like(x)        # nn.Dropout(p=1.0) zeroes everything

    # Cast pe once outside the kernel -> half-width DMA for bf16 x, no in-kernel promotion.
    pe_slice = pe[:S].astype(dtype)     # [S, 1, D]

    # Lane-dense layout: if D is not 128-aligned, collapse batch into the lane dim
    # so stores are full-width (x/out reshape is free; pe is broadcast once here).
    if D % 128 == 0:
        xk, pek = x, pe_slice
        Bk, Dk = B, D
    else:
        xk = x.reshape(S, 1, B * D)
        pek = jnp.broadcast_to(pe_slice, (S, B, D)).reshape(S, 1, B * D)
        Bk, Dk = 1, B * D

    if use_hw_prng is None:
        use_hw_prng = jax.default_backend() == "tpu"
    stream_bits = apply_dropout and not use_hw_prng

    itemsize = jnp.dtype(dtype).itemsize
    if tile_s is None:
        # Streamed-bits fallback adds an extra x-sized input stream -> smaller blocks;
        # eval / hw-PRNG training streams only x, pe, out -> bigger blocks are fine.
        target = (2 if stream_bits else 4) * 1024 * 1024
        tile_s = _choose_tile_s(S, Bk * Dk * itemsize, target)
    tile_s = int(max(1, min(int(tile_s), S)))
    grid = (pl.cdiv(S, tile_s),)        # no divisibility requirement; tail is masked

    compiler_params = pltpu.CompilerParams(
        dimension_semantics=("parallel",),   # independent steps -> v7x dual-TC sharding
        vmem_limit_bytes=32 * 1024 * 1024,   # explicit; safe on v5e/v6e/v7x
    )
    out_shape = jax.ShapeDtypeStruct((S, Bk, Dk), dtype)

    if not apply_dropout:
        # NOTE: in pure inference, a plain `x + pe[:S]` left to XLA fusion with the
        # surrounding layer is cheaper than any standalone kernel; we keep the
        # (dropout-free) Pallas path here since the point is the kernel itself.
        block = pl.BlockSpec((tile_s, Bk, Dk), lambda i: (i, 0, 0))
        pe_block = pl.BlockSpec((tile_s, 1, Dk), lambda i: (i, 0, 0))
        out = pl.pallas_call(
            _add_pe_kernel,
            out_shape=out_shape,
            grid=grid,
            in_specs=[block, pe_block],
            out_specs=block,
            compiler_params=compiler_params,
        )(xk, pek)
        return out.reshape(S, B, D)

    # ---- training mode -------------------------------------------------------
    if rng_key is None:
        rng_key = jax.random.PRNGKey(0)

    # Map the uint32 threshold p*2^32 into int32 space (bits viewed as int32).
    threshold = int(round(p * float(1 << 32))) - (1 << 31)
    threshold = max(-(1 << 31), min((1 << 31) - 1, threshold))
    inv_keep = 1.0 / (1.0 - p)

    if use_hw_prng:
        seed = jax.random.randint(rng_key, (1,), 0, jnp.iinfo(jnp.int32).max,
                                  dtype=jnp.int32)
        kernel = partial(_add_pe_dropout_hwprng_kernel,
                         threshold=threshold, inv_keep=inv_keep)
        grid_spec = pltpu.PrefetchScalarGridSpec(
            num_scalar_prefetch=1,
            grid=grid,
            in_specs=[pl.BlockSpec((tile_s, Bk, Dk), lambda i, seed_ref: (i, 0, 0)),
                      pl.BlockSpec((tile_s, 1, Dk), lambda i, seed_ref: (i, 0, 0))],
            out_specs=pl.BlockSpec((tile_s, Bk, Dk), lambda i, seed_ref: (i, 0, 0)),
        )
        out = pl.pallas_call(
            kernel,
            out_shape=out_shape,
            grid_spec=grid_spec,
            compiler_params=compiler_params,
        )(seed, xk, pek)
    else:
        # TODO(synk): this fallback keeps an extra HBM stream of random bits; it is
        # only used when the backend is not a real TPU (no hardware-PRNG lowering).
        bits = jax.lax.bitcast_convert_type(
            jax.random.bits(rng_key, (S, Bk, Dk), dtype=jnp.uint32), jnp.int32)
        kernel = partial(_add_pe_dropout_bits_kernel,
                         threshold=threshold, inv_keep=inv_keep)
        block = pl.BlockSpec((tile_s, Bk, Dk), lambda i: (i, 0, 0))
        pe_block = pl.BlockSpec((tile_s, 1, Dk), lambda i: (i, 0, 0))
        out = pl.pallas_call(
            kernel,
            out_shape=out_shape,
            grid=grid,
            in_specs=[block, pe_block, block],
            out_specs=block,
            compiler_params=compiler_params,
        )(xk, pek, bits)

    return out.reshape(S, B, D)


# ----------------------------------------------------------------------------
# Demo / self-check
# ----------------------------------------------------------------------------
if __name__ == "__main__":
    MAX_LEN = 64  # module default is 5000; shrunk for the demo
    key = jax.random.PRNGKey(0)
    kx, kd = jax.random.split(key)

    # --- case 1: lane-dense d_model (multiple of 128), eval mode --------------
    S, B, D = 8, 2, 128
    x = jax.random.normal(kx, (S, B, D), dtype=jnp.float32)
    pe = make_positional_encoding_buffer(D, MAX_LEN)
    ref = x + pe[:S]

    out_eval = jax.block_until_ready(
        positional_encoding(x, pe, dropout_p=0.1, training=False))
    assert out_eval.shape == (S, B, D)
    assert jnp.allclose(out_eval, ref, atol=1e-6), "eval-mode mismatch (D=128)"

    # --- case 2: training mode, dropout p=0.1 (in-kernel hardware PRNG on TPU) -
    p = 0.1
    out_train = jax.block_until_ready(
        positional_encoding(x, pe, dropout_p=p, training=True, rng_key=kd))
    assert out_train.shape == (S, B, D)
    scaled_ref = ref / (1.0 - p)
    ok = jnp.logical_or(jnp.isclose(out_train, 0.0, atol=1e-6),
                        jnp.isclose(out_train, scaled_ref, rtol=1e-5, atol=1e-5))
    assert bool(jnp.all(ok)), "training-mode dropout values inconsistent"
    drop_frac = float(jnp.mean((out_train == 0.0).astype(jnp.float32)))
    assert 0.01 < drop_frac < 0.30, f"dropout rate looks wrong: {drop_frac}"

    # --- case 3: small non-128 d_model (collapse path) + uneven tail tile ------
    S2, B2, D2 = 12, 2, 32
    x2 = jax.random.normal(kx, (S2, B2, D2), dtype=jnp.float32)
    pe2 = make_positional_encoding_buffer(D2, MAX_LEN)
    out2 = jax.block_until_ready(
        positional_encoding(x2, pe2, dropout_p=0.1, training=False, tile_s=8))
    assert out2.shape == (S2, B2, D2)
    assert jnp.allclose(out2, x2 + pe2[:S2], atol=1e-6), "eval-mode mismatch (D=32 path)"

    # --- case 4: training with an uneven tail block (masked last tile + PRNG) --
    out3 = jax.block_until_ready(
        positional_encoding(x2, pe2, dropout_p=p, training=True, rng_key=kd, tile_s=8))
    ref2 = (x2 + pe2[:S2]) / (1.0 - p)
    ok3 = jnp.logical_or(jnp.isclose(out3, 0.0, atol=1e-6),
                         jnp.isclose(out3, ref2, rtol=1e-5, atol=1e-5))
    assert bool(jnp.all(ok3)), "training-mode dropout values inconsistent (tail tile)"

    print("KERNEL_OK")
</pallas_src>

<mosaic_0001>
module attributes {stable_mosaic.version = 11 : i64} {
  func.func @_add_pe_kernel(%arg0: i32, %arg1: memref<8x2x128xf32, #tpu.memory_space<vmem>>, %arg2: memref<8x1x128xf32, #tpu.memory_space<vmem>>, %arg3: memref<8x2x128xf32, #tpu.memory_space<vmem>>) attributes {dimension_semantics = [#tpu.dimension_semantics<parallel>], iteration_bounds = array<i64: 1>, scalar_prefetch = 0 : i64, scratch_operands = 0 : i64, tpu.core_type = #tpu.core_type<tc>, window_params = [{transform_indices = @transform_0, window_bounds = array<i64: 8, 2, 128>}, {transform_indices = @transform_1, window_bounds = array<i64: 8, 1, 128>}, {transform_indices = @transform_2, window_bounds = array<i64: 8, 2, 128>}]} {
    %c0 = arith.constant 0 : index
    %c0_0 = arith.constant 0 : index
    %c0_1 = arith.constant 0 : index
    %0 = vector.load %arg1[%c0, %c0_0, %c0_1] : memref<8x2x128xf32, #tpu.memory_space<vmem>>, vector<8x2x128xf32>
    %c0_2 = arith.constant 0 : index
    %c0_3 = arith.constant 0 : index
    %c0_4 = arith.constant 0 : index
    %1 = vector.load %arg2[%c0_2, %c0_3, %c0_4] : memref<8x1x128xf32, #tpu.memory_space<vmem>>, vector<8x1x128xf32>
    %2 = vector.broadcast %1 : vector<8x1x128xf32> to vector<8x2x128xf32>
    %3 = arith.addf %0, %2 : vector<8x2x128xf32>
    %c0_5 = arith.constant 0 : index
    %c0_6 = arith.constant 0 : index
    %c0_7 = arith.constant 0 : index
    %4 = vector.load %arg3[%c0_5, %c0_6, %c0_7] : memref<8x2x128xf32, #tpu.memory_space<vmem>>, vector<8x2x128xf32>
    tpu.vector_store %arg3[%c0_5, %c0_6, %c0_7], %3 {strides = array<i32>} : memref<8x2x128xf32, #tpu.memory_space<vmem>>, vector<8x2x128xf32>,
    return
  }
  func.func @transform_0(%arg0: i32) -> (i32, i32, i32) {
    %c0_i32 = arith.constant 0 : i32
    %c0_i32_0 = arith.constant 0 : i32
    %c0_i32_1 = arith.constant 0 : i32
    return %arg0, %c0_i32, %c0_i32_0 : i32, i32, i32
  }
  func.func @transform_1(%arg0: i32) -> (i32, i32, i32) {
    %c0_i32 = arith.constant 0 : i32
    %c0_i32_0 = arith.constant 0 : i32
    %c0_i32_1 = arith.constant 0 : i32
    return %arg0, %c0_i32, %c0_i32_0 : i32, i32, i32
  }
  func.func @transform_2(%arg0: i32) -> (i32, i32, i32) {
    %c0_i32 = arith.constant 0 : i32
    %c0_i32_0 = arith.constant 0 : i32
    %c0_i32_1 = arith.constant 0 : i32
    return %arg0, %c0_i32, %c0_i32_0 : i32, i32, i32
  }
}

</mosaic_0001>

<llo_original>
// kernel: tpu_custom_call.1
$region0: #{tpu_custom_call.1}
  #allocation0 [shape = 'u32[]', space=smem, size = 0x4, offset = 0x4, fixed_abs, tag = 'smem constant byte address 0x4 - core index']
  #allocation1 [shape = 'u32[144,128]{1,0:T(1,128)}', space=vmem, size = 0x12000, scoped, tag = 'internal scratch']
  %s0 = inlined_call_operand.hbm [shape: f32[8,2,128], index: 0, kind: input, shape index: {}]
  %s1 = inlined_call_operand.hbm [shape: f32[8,1,128], index: 1, kind: input, shape index: {}]
  %s2 = inlined_call_operand.hbm [shape: f32[8,2,128], index: 2, kind: output, shape index: {}]
  %s3 = sld [smem:[#allocation0]]
  $region26: #{tpu_custom_call.1} parent=0
    _
  %s5 = ssub.s32 1, %s3
  %s6 = scalar_select 0, %s5, %s3
  $region1: #{tpu_custom_call.1} parent=0
    #allocation2 [shape = 'u8[8192]{0}', space=vmem, size = 0x2000, scoped, tag = 'input window, operand 0, single buffered']
    #allocation3 [shape = 's32[1]{0}', space=sflag, size = 0x4, scoped, tag = 'scoped memory for tpu_custom_call.1']
    #allocation4 [shape = 's32[1]{0}', space=sflag, size = 0x4, scoped, tag = 'scoped memory for tpu_custom_call.1']
    #allocation5 [shape = 'u8[4096]{0}', space=vmem, size = 0x1000, scoped, tag = 'input window, operand 1, single buffered']
    #allocation6 [shape = 's32[1]{0}', space=sflag, size = 0x4, scoped, tag = 'scoped memory for tpu_custom_call.1']
    #allocation7 [shape = 'u8[8192]{0}', space=vmem, size = 0x2000, scoped, tag = 'output window, operand 0, single buffered']
    %7 = vsyncpa [#allocation3], 0
    %8 = vsyncpa [#allocation6], 0
    %9 = vsyncpa [#allocation4], 0
    // Predicated region
    $region2: #{tpu_custom_call.1} parent=1 // pred_check
      _
    $region3: #{tpu_custom_call.1} parent=1 // pred_check_branch
      %11 = sbr.rel (0) target = $region5
    $region4: #{tpu_custom_call.1} parent=1 // pred_region
      %s13 = ssub.s32 256, 256
      %14 = vsyncadd [#allocation3], %s13
      %s15 = sshll.u32 [#allocation2], 4
      %s16 = int_to_ptr.vmem [resolvable:$true] %s15
      %21 = dma.hbm_to_vmem [thread:$0]  %s0, 256, %s16, [#allocation3], 32, 32, 2
    $region5: #{tpu_custom_call.1} parent=1 // pred_fallthru
      _
    // Predicated region
    $region6: #{tpu_custom_call.1} parent=1 // pred_check
      _
    $region7: #{tpu_custom_call.1} parent=1 // pred_check_branch
      %23 = sbr.rel (0) target = $region9
    $region8: #{tpu_custom_call.1} parent=1 // pred_region
      %s25 = ssub.s32 128, 128
      %26 = vsyncadd [#allocation6], %s25
      %s27 = sshll.u32 [#allocation5], 4
      %s28 = int_to_ptr.vmem [resolvable:$true] %s27
      %33 = dma.hbm_to_vmem [thread:$0]  %s1, 128, %s28, [#allocation6], 16, 16, 1
    $region9: #{tpu_custom_call.1} parent=1 // pred_fallthru
      _
    // Predicated region
    $region10: #{tpu_custom_call.1} parent=1 // pred_check
      _
    $region11: #{tpu_custom_call.1} parent=1 // pred_check_branch
      %35 = sbr.rel (0) target = $region13
    $region12: #{tpu_custom_call.1} parent=1 // pred_region
      %36 = dma.done [#allocation3], 256
    $region13: #{tpu_custom_call.1} parent=1 // pred_fallthru
      _
    // Predicated region
    $region14: #{tpu_custom_call.1} parent=1 // pred_check
      _
    $region15: #{tpu_custom_call.1} parent=1 // pred_check_branch
      %38 = sbr.rel (0) target = $region17
    $region16: #{tpu_custom_call.1} parent=1 // pred_region
      %39 = dma.done [#allocation6], 128
    $region17: #{tpu_custom_call.1} parent=1 // pred_fallthru
      _
    %v40 = vld [vmem:[#allocation2] sm:$0x3]
    %v41 = vld [vmem:[#allocation2 + $0x2] sm:$0x3]
    %v42 = vld [vmem:[#allocation2 + $0x4] sm:$0x3]
    %v43 = vld [vmem:[#allocation2 + $0x6] sm:$0x3]
    %v44 = vld [vmem:[#allocation2 + $0x8] sm:$0x3]
    %v45 = vld [vmem:[#allocation2 + $0xa] sm:$0x3]
    %v46 = vld [vmem:[#allocation2 + $0xc] sm:$0x3]
    %v47 = vld [vmem:[#allocation2 + $0xe] sm:$0x3]
    %v48 = vld [vmem:[#allocation5] sm:$0x1]
    %v49 = vld [vmem:[#allocation5 + $0x1] sm:$0x1]
    %v50 = vld [vmem:[#allocation5 + $0x2] sm:$0x1]
    %v51 = vld [vmem:[#allocation5 + $0x3] sm:$0x1]
    %v52 = vld [vmem:[#allocation5 + $0x4] sm:$0x1]
    %v53 = vld [vmem:[#allocation5 + $0x5] sm:$0x1]
    %v54 = vld [vmem:[#allocation5 + $0x6] sm:$0x1]
    %v55 = vld [vmem:[#allocation5 + $0x7] sm:$0x1]
    %v64 = vlaneseq
    %v65 = vshrl.u32 %v64, 7
    %v66 = vsub.s32 0, %v65
    %v67 = vrot.slane %v48, %v66
    %v68 = vlaneseq
    %v69 = vshrl.u32 %v68, 7
    %v70 = vsub.s32 0, %v69
    %v71 = vrot.slane %v49, %v70
    %v72 = vlaneseq
    %v73 = vshrl.u32 %v72, 7
    %v74 = vsub.s32 0, %v73
    %v75 = vrot.slane %v50, %v74
    %v76 = vlaneseq
    %v77 = vshrl.u32 %v76, 7
    %v78 = vsub.s32 0, %v77
    %v79 = vrot.slane %v51, %v78
    %v80 = vlaneseq
    %v81 = vshrl.u32 %v80, 7
    %v82 = vsub.s32 0, %v81
    %v83 = vrot.slane %v52, %v82
    %v84 = vlaneseq
    %v85 = vshrl.u32 %v84, 7
    %v86 = vsub.s32 0, %v85
    %v87 = vrot.slane %v53, %v86
    %v88 = vlaneseq
    %v89 = vshrl.u32 %v88, 7
    %v90 = vsub.s32 0, %v89
    %v91 = vrot.slane %v54, %v90
    %v92 = vlaneseq
    %v93 = vshrl.u32 %v92, 7
    %v94 = vsub.s32 0, %v93
    %v95 = vrot.slane %v55, %v94
    %v104 = vadd.f32 %v40, %v67
    %v105 = vadd.f32 %v41, %v71
    %v106 = vadd.f32 %v42, %v75
    %v107 = vadd.f32 %v43, %v79
    %v108 = vadd.f32 %v44, %v83
    %v109 = vadd.f32 %v45, %v87
    %v110 = vadd.f32 %v46, %v91
    %v111 = vadd.f32 %v47, %v95
    %112 = vst [vmem:[#allocation7] sm:$0x3] %v104
    %113 = vst [vmem:[#allocation7 + $0x2] sm:$0x3] %v105
    %114 = vst [vmem:[#allocation7 + $0x4] sm:$0x3] %v106
    %115 = vst [vmem:[#allocation7 + $0x6] sm:$0x3] %v107
    %116 = vst [vmem:[#allocation7 + $0x8] sm:$0x3] %v108
    %117 = vst [vmem:[#allocation7 + $0xa] sm:$0x3] %v109
    %118 = vst [vmem:[#allocation7 + $0xc] sm:$0x3] %v110
    %119 = vst [vmem:[#allocation7 + $0xe] sm:$0x3] %v111
    // Predicated region
    $region18: #{tpu_custom_call.1} parent=1 // pred_check
      _
    $region19: #{tpu_custom_call.1} parent=1 // pred_check_branch
      %121 = sbr.rel (0) target = $region21
    $region20: #{tpu_custom_call.1} parent=1 // pred_region
      %s123 = ssub.s32 256, 256
      %124 = vsyncadd [#allocation4], %s123
      %s125 = sshll.u32 [#allocation7], 4
      %s126 = int_to_ptr.vmem [resolvable:$true] %s125
      %131 = dma.vmem_to_hbm [thread:$0]  %s126, 256, %s2, [#allocation4], 32, 32, 2
    $region21: #{tpu_custom_call.1} parent=1 // pred_fallthru
      _
    // Predicated region
    $region22: #{tpu_custom_call.1} parent=1 // pred_check
      _
    $region23: #{tpu_custom_call.1} parent=1 // pred_check_branch
      %133 = sbr.rel (0) target = $region25
    $region24: #{tpu_custom_call.1} parent=1 // pred_region
      %134 = dma.done [#allocation4], 256
    $region25: #{tpu_custom_call.1} parent=1 // pred_fallthru
      _
    %135 = vsyncpa [#allocation3], 1
    %136 = vsyncpa [#allocation6], 1
    %137 = vsyncpa [#allocation4], 1

</llo_original>
